<compile_context>
chip_gen: v5e
topology: v5e:2x2
jax: 0.10.0
libtpu: 0.0.40
codegen_flags: <defaults>
</compile_context>

<pallas_src>
import functools

import numpy as np
import jax
import jax.numpy as jnp
from jax import lax
from jax.experimental import pallas as pl
from jax.experimental.pallas import tpu as pltpu


# ------------------------------ kernels -------------------------------------

def _rs_fold_kernel(x_ref, o_ref, *, acc_dtype):
    """World folded into the block: x_ref (W, rt, lt) -> o_ref (rt, lt)."""
    o_ref[...] = jnp.sum(x_ref[...].astype(acc_dtype), axis=0).astype(o_ref.dtype)


def _rs_grid_inplace_kernel(x_ref, o_ref):
    """World as innermost grid axis; accumulate directly into the resident
    output block (input dtype == accumulation dtype, e.g. f32 / int32)."""
    w = pl.program_id(2)

    @pl.when(w == 0)
    def _():
        o_ref[...] = x_ref[...]

    @pl.when(w != 0)
    def _():
        o_ref[...] += x_ref[...]


def _rs_grid_acc_kernel(x_ref, o_ref, acc_ref):
    """World as innermost grid axis; wide scratch accumulator, cast at end."""
    w = pl.program_id(2)

    @pl.when(w == 0)
    def _():
        acc_ref[...] = x_ref[...].astype(acc_ref.dtype)

    @pl.when(w != 0)
    def _():
        acc_ref[...] += x_ref[...].astype(acc_ref.dtype)

    @pl.when(w == pl.num_programs(2) - 1)
    def _():
        o_ref[...] = acc_ref[...].astype(o_ref.dtype)


# --------------------------- tile derivation ---------------------------------

def _sublane_unit(dtype):
    """Packed-dtype sublane unit: 8 for 4-byte, 16 for 2-byte, 32 for 1-byte."""
    return max(8, 32 // np.dtype(dtype).itemsize)


def _largest_lane_divisor(d, fits):
    """Largest divisor of d that is a multiple of 128 and satisfies fits()."""
    if d % 128 != 0:
        return d                      # cannot split legally; use the full dim
    for t in range(d, 0, -128):
        if d % t == 0 and fits(t):
            return t
    return 128


def _derive_tiles(world_block, out_rows, d, in_bytes, acc_bytes, unit,
                  *, vmem_budget, max_row_tile, needs_scratch):
    """Pick (row_tile, lane_tile) so double-buffered in/out (+scratch) fits."""
    def cost(rt, lt):
        return (2 * world_block * rt * lt * in_bytes   # double-buffered input
                + 2 * rt * lt * in_bytes               # double-buffered output
                + (rt * lt * acc_bytes if needs_scratch else 0))

    if out_rows < unit:
        # Tiny rank segment: a single full-dim row block (always layout-legal).
        row_tile = out_rows
        if cost(row_tile, d) <= vmem_budget:
            return row_tile, d
        return row_tile, _largest_lane_divisor(
            d, lambda t: cost(row_tile, t) <= vmem_budget)

    # Lane tile: prefer full D; only split when even the minimal row tile
    # would overflow the VMEM budget.
    lane_tile = d
    if cost(unit, d) > vmem_budget:
        lane_tile = _largest_lane_divisor(
            d, lambda t: cost(unit, t) <= vmem_budget)

    # Row tile: largest multiple of the sublane unit under the budget, capped
    # at max_row_tile and at the segment size (so blocks never exceed it).
    row_cap = max(unit, min(max_row_tile, (out_rows // unit) * unit))
    if cost(row_cap, lane_tile) <= vmem_budget:
        return row_cap, lane_tile
    row_tile = unit
    while row_tile * 2 <= row_cap and cost(row_tile * 2, lane_tile) <= vmem_budget:
        row_tile *= 2
    return row_tile, lane_tile


# ------------------------------- wrapper -------------------------------------

def reduce_scatter_tensor_uneven(x, input_split_sizes, rank, *,
                                 max_row_tile=512,
                                 vmem_budget_bytes=12 * 1024 * 1024,
                                 world_fold_max=8):
    """Pallas equivalent of reduce_scatter_tensor_uneven for one rank.

    x                : [world, total_rows, D] -- per-rank full tensors stacked
                       along axis 0 (simulated world on one device).
    input_split_sizes: python list of ints, sum == total_rows.
    rank             : which rank's output segment to produce.

    Returns [input_split_sizes[rank], D] with dtype == x.dtype.
    """
    world, total_rows, d = x.shape
    splits = [int(s) for s in input_split_sizes]
    assert sum(splits) == total_rows
    out_rows = splits[rank]
    offset = sum(splits[:rank])
    assert offset + out_rows <= total_rows

    if out_rows == 0:
        return jnp.zeros((0, d), dtype=x.dtype)

    in_dt = np.dtype(x.dtype)
    acc_dt = np.dtype(np.int32) if jnp.issubdtype(in_dt, jnp.integer) \
        else np.dtype(np.float32)
    unit = _sublane_unit(in_dt)

    fold = world <= world_fold_max
    needs_scratch = (not fold) and (in_dt != acc_dt)
    row_tile, lane_tile = _derive_tiles(
        world if fold else 1, out_rows, d, in_dt.itemsize, acc_dt.itemsize,
        unit, vmem_budget=vmem_budget_bytes, max_row_tile=max_row_tile,
        needs_scratch=needs_scratch)

    # Direct (no pre-slice) path: fold the rank's row offset into the
    # index_map as a static block offset.  Needs a row tile that divides the
    # offset and tiled coverage that stays inside the full tensor.
    direct = False
    if out_rows >= unit and offset % unit == 0:
        rt = row_tile
        while rt > unit and offset % rt != 0:
            rt -= unit
        if offset % rt == 0:
            n_blocks = -(-out_rows // rt)
            if offset + n_blocks * rt <= total_rows:
                direct = True
                row_tile = rt

    if direct:
        x_in = x
        row_block_off = offset // row_tile
        fuse = False
    else:
        # Unaligned/tiny segment: static row slice is unavoidable with
        # BlockSpec pipelining; ask XLA to fuse it into the operand read so it
        # is not materialized as a separate HBM copy.
        x_in = lax.slice(x, (0, offset, 0), (world, offset + out_rows, d))
        row_block_off = 0
        fuse = True

    grid_rows = -(-out_rows // row_tile)
    grid_lanes = -(-d // lane_tile)

    cost = pl.CostEstimate(
        flops=(world - 1) * out_rows * d,
        transcendentals=0,
        bytes_accessed=(world * in_dt.itemsize + in_dt.itemsize) * out_rows * d)

    if fold:
        grid = (grid_rows, grid_lanes)
        in_specs = [pl.BlockSpec((world, row_tile, lane_tile),
                                 lambda i, j: (0, row_block_off + i, j))]
        out_specs = pl.BlockSpec((row_tile, lane_tile), lambda i, j: (i, j))
        kernel = functools.partial(_rs_fold_kernel, acc_dtype=acc_dt)
        scratch_shapes = []
        dims = ("parallel", "parallel")
    else:
        grid = (grid_rows, grid_lanes, world)      # world innermost (reduction)
        in_specs = [pl.BlockSpec((None, row_tile, lane_tile),
                                 lambda i, j, w: (w, row_block_off + i, j))]
        out_specs = pl.BlockSpec((row_tile, lane_tile), lambda i, j, w: (i, j))
        if needs_scratch:
            kernel = _rs_grid_acc_kernel
            scratch_shapes = [pltpu.VMEM((row_tile, lane_tile), acc_dt)]
        else:
            kernel = _rs_grid_inplace_kernel
            scratch_shapes = []
        dims = ("parallel", "parallel", "arbitrary")

    return pl.pallas_call(
        kernel,
        out_shape=jax.ShapeDtypeStruct((out_rows, d), x.dtype),
        grid_spec=pltpu.PrefetchScalarGridSpec(
            num_scalar_prefetch=0,
            grid=grid,
            in_specs=in_specs,
            out_specs=out_specs,
            scratch_shapes=scratch_shapes,
        ),
        compiler_params=pltpu.CompilerParams(
            dimension_semantics=dims,
            allow_input_fusion=[True] if fuse else None,
        ),
        cost_estimate=cost,
    )(x_in)


# -------------------------------- test ---------------------------------------

if __name__ == "__main__":
    key = jax.random.PRNGKey(0)
    ok = True

    world_size = 4
    input_split_sizes = [3, 5, 2, 6]          # uneven, tiny per-rank segments
    total_rows = sum(input_split_sizes)       # 16
    d = 128

    x = jax.random.normal(key, (world_size, total_rows, d), dtype=jnp.float32)
    reduced_ref = jnp.sum(x, axis=0)

    # f32, folded-world path, every rank (aligned and unaligned offsets).
    off = 0
    for r, rows in enumerate(input_split_sizes):
        out = jax.block_until_ready(
            reduce_scatter_tensor_uneven(x, input_split_sizes, r))
        ok = ok and out.shape == (rows, d) and bool(
            jnp.allclose(out, reduced_ref[off:off + rows], atol=1e-5, rtol=1e-5))
        off += rows

    # f32, grid-over-world path (world_fold_max=0 forces the 3-D grid).
    out = jax.block_until_ready(
        reduce_scatter_tensor_uneven(x, input_split_sizes, 2, world_fold_max=0))
    ok = ok and bool(jnp.allclose(out, reduced_ref[8:10], atol=1e-5, rtol=1e-5))

    # bf16: folded path (f32 accumulation, cast once at the end).
    xb = x.astype(jnp.bfloat16)
    refb = jnp.sum(xb.astype(jnp.float32), axis=0)
    outb = jax.block_until_ready(
        reduce_scatter_tensor_uneven(xb, input_split_sizes, 1))
    exp1 = refb[3:8].astype(jnp.bfloat16).astype(jnp.float32)
    ok = ok and outb.shape == (5, d) and bool(
        jnp.allclose(outb.astype(jnp.float32), exp1, atol=5e-2, rtol=2e-2))

    # bf16, grid-over-world path with f32 scratch accumulator.
    outb2 = jax.block_until_ready(
        reduce_scatter_tensor_uneven(xb, input_split_sizes, 3, world_fold_max=0))
    exp3 = refb[10:16].astype(jnp.bfloat16).astype(jnp.float32)
    ok = ok and outb2.shape == (6, d) and bool(
        jnp.allclose(outb2.astype(jnp.float32), exp3, atol=5e-2, rtol=2e-2))

    # int32: exact integer accumulation (no f32 round-trip).
    xi = jax.random.randint(jax.random.PRNGKey(1),
                            (world_size, total_rows, d), -1000, 1000,
                            dtype=jnp.int32)
    refi = jnp.sum(xi, axis=0)
    outi = jax.block_until_ready(
        reduce_scatter_tensor_uneven(xi, input_split_sizes, 0))
    ok = ok and bool(jnp.array_equal(outi, refi[:3]))

    # Tile-aligned offsets: exercise the zero-copy (no-slice) direct path with
    # multiple row blocks and a masked trailing partial block.
    splits2 = [8, 12, 8, 4]
    total2 = sum(splits2)                      # 32
    d2 = 256
    x2 = jax.random.normal(jax.random.PRNGKey(2),
                           (world_size, total2, d2), dtype=jnp.float32)
    ref2 = jnp.sum(x2, axis=0)
    out2 = jax.block_until_ready(reduce_scatter_tensor_uneven(x2, splits2, 1))
    ok = ok and out2.shape == (12, d2) and bool(
        jnp.allclose(out2, ref2[8:20], atol=1e-5, rtol=1e-5))
    out3 = jax.block_until_ready(
        reduce_scatter_tensor_uneven(x2, splits2, 0, world_fold_max=0))
    ok = ok and out3.shape == (8, d2) and bool(
        jnp.allclose(out3, ref2[:8], atol=1e-5, rtol=1e-5))

    print("KERNEL_OK" if ok else "KERNEL_MISMATCH")
</pallas_src>

<mosaic_0001>
module attributes {stable_mosaic.version = 11 : i64} {
  func.func @_rs_fold_kernel(%arg0: i32, %arg1: i32, %arg2: memref<4x3x128xf32, #tpu.memory_space<vmem>>, %arg3: memref<3x128xf32, #tpu.memory_space<vmem>>) attributes {dimension_semantics = [#tpu.dimension_semantics<parallel>, #tpu.dimension_semantics<parallel>], iteration_bounds = array<i64: 1, 1>, scalar_prefetch = 0 : i64, scratch_operands = 0 : i64, tpu.core_type = #tpu.core_type<tc>, window_params = [{transform_indices = @transform_0, window_bounds = array<i64: 4, 3, 128>}, {transform_indices = @transform_1, window_bounds = array<i64: 3, 128>}]} {
    %c0 = arith.constant 0 : index
    %c0_0 = arith.constant 0 : index
    %c0_1 = arith.constant 0 : index
    %0 = vector.load %arg2[%c0, %c0_0, %c0_1] : memref<4x3x128xf32, #tpu.memory_space<vmem>>, vector<4x3x128xf32>
    %cst = arith.constant dense<0.000000e+00> : vector<3x128xf32>
    %1 = vector.multi_reduction <add>, %0, %cst [0] : vector<4x3x128xf32> to vector<3x128xf32>
    %c0_2 = arith.constant 0 : index
    %c0_3 = arith.constant 0 : index
    %2 = vector.load %arg3[%c0_2, %c0_3] : memref<3x128xf32, #tpu.memory_space<vmem>>, vector<3x128xf32>
    tpu.vector_store %arg3[%c0_2, %c0_3], %1 {strides = array<i32>} : memref<3x128xf32, #tpu.memory_space<vmem>>, vector<3x128xf32>,
    return
  }
  func.func @transform_0(%arg0: i32, %arg1: i32) -> (i32, i32, i32) {
    %c0_i32 = arith.constant 0 : i32
    %0 = arith.addi %c0_i32, %arg0 : i32
    %c0_i32_0 = arith.constant 0 : i32
    %c0_i32_1 = arith.constant 0 : i32
    return %c0_i32_0, %0, %arg1 : i32, i32, i32
  }
  func.func @transform_1(%arg0: i32, %arg1: i32) -> (i32, i32) {
    %c0_i32 = arith.constant 0 : i32
    return %arg0, %arg1 : i32, i32
  }
}

</mosaic_0001>

<llo_original>
// kernel: tpu_custom_call.1
$region0: #{tpu_custom_call.1}
  #allocation0 [shape = 'u32[]', space=smem, size = 0x4, offset = 0x4, fixed_abs, tag = 'smem constant byte address 0x4 - core index']
  #allocation1 [shape = 'u32[72,128]{1,0:T(1,128)}', space=vmem, size = 0x9000, scoped, tag = 'internal scratch']
  %s0 = inlined_call_operand.vmem [shape: f32[4,3,128], index: 0, kind: input, shape index: {}]
  %s1 = inlined_call_operand.hbm [shape: f32[3,128], index: 1, kind: output, shape index: {}]
  %s2 = sld [smem:[#allocation0]]
  $region14: #{tpu_custom_call.1} parent=0
    _
  %s4 = ssub.s32 1, %s2
  %s5 = scalar_select 0, %s4, %s2
  $region1: #{tpu_custom_call.1} parent=0
    #allocation2 [shape = 'u8[2048]{0}', space=vmem, size = 0x800, scoped, tag = 'output window, operand 0, single buffered']
    #allocation3 [shape = 's32[1]{0}', space=sflag, size = 0x4, scoped, tag = 'scoped memory for tpu_custom_call.1']
    %6 = vsyncpa [#allocation3], 0
    // Predicated region
    $region2: #{tpu_custom_call.1} parent=1 // pred_check
      _
    $region3: #{tpu_custom_call.1} parent=1 // pred_check_branch
      %8 = sbr.rel (0) target = $region5
    $region4: #{tpu_custom_call.1} parent=1 // pred_region
      _
    $region5: #{tpu_custom_call.1} parent=1 // pred_fallthru
      _
    %v9 = vld [vmem:[%s0] sm:$0x7]
    %v10 = vld [vmem:[%s0 + $0x4] sm:$0x7]
    %v11 = vld [vmem:[%s0 + $0x8] sm:$0x7]
    %v12 = vld [vmem:[%s0 + $0xc] sm:$0x7]
    %vm13 = vcmask 1042432
    %v14 = vsel %vm13, %v9, 0.0
    %v15 = vsel %vm13, %v10, 0.0
    %v16 = vadd.f32 %v14, %v15
    %v17 = vsel %vm13, %v11, 0.0
    %v18 = vadd.f32 %v16, %v17
    %v19 = vsel %vm13, %v12, 0.0
    %v20 = vadd.f32 %v18, %v19
    %21 = vst [vmem:[#allocation2] sm:$0x7] %v20
    // Predicated region
    $region6: #{tpu_custom_call.1} parent=1 // pred_check
      _
    $region7: #{tpu_custom_call.1} parent=1 // pred_check_branch
      %23 = sbr.rel (0) target = $region9
    $region8: #{tpu_custom_call.1} parent=1 // pred_region
      %25 = vsyncadd [#allocation3], 0
      %s27 = sshll.u32 [#allocation2], 4
      %s28 = int_to_ptr.vmem [resolvable:$true] %s27
      %s29 = sshll.u32 %s1, 4
      %s30 = int_to_ptr.hbm [resolvable:$true] %s29
      %32 = dma.vmem_to_hbm [thread:$0]  %s28, 64, %s30, [#allocation3]
    $region9: #{tpu_custom_call.1} parent=1 // pred_fallthru
      _
    // Predicated region
    $region10: #{tpu_custom_call.1} parent=1 // pred_check
      _
    $region11: #{tpu_custom_call.1} parent=1 // pred_check_branch
      %34 = sbr.rel (0) target = $region13
    $region12: #{tpu_custom_call.1} parent=1 // pred_region
      %36 = dma.done [#allocation3], 64
    $region13: #{tpu_custom_call.1} parent=1 // pred_fallthru
      _
    %37 = vsyncpa [#allocation3], 1

</llo_original>
